<compile_context>
chip_gen: v6e
topology: v6e:2x2x1
jax: 0.10.0
libtpu: 0.0.40
codegen_flags: <defaults>
</compile_context>

<pallas_src>
import math

import jax
import jax.numpy as jnp
from jax.experimental import pallas as pl
from jax.experimental.pallas import tpu as pltpu

_LANE = 128
_MAX_TR_F32 = 2048      # rows per grid step for 4-byte inputs: 1 MiB / input / step
_SMOOTH = 1e-16
_LOG_CLAMP = -100.0     # nn.BCELoss clamps its log terms at -100


def _round_up(x, m):
    return ((x + m - 1) // m) * m


def _num_tensorcores():
    """2 on v7x (two TensorCores behind one device), else 1 (v5e/v6e single TC)."""
    try:
        kind = jax.devices()[0].device_kind.lower()
    except Exception:
        return 1
    return 2 if ("v7" in kind or "7x" in kind) else 1


def _choose_tr(n_rows, max_tr, row_mult):
    """Largest row-block <= max_tr dividing n_rows (avoids padding); fall back to
    max_tr (caller pads rows) when the best divisor would make blocks tiny."""
    cap = min(max_tr, n_rows)
    cap -= cap % row_mult
    cap = max(cap, row_mult)
    for cand in range(cap, 0, -row_mult):
        if n_rows % cand == 0:
            if 4 * cand >= cap:      # big enough -> use it, no extra padding
                return cand
            break
    return cap                        # caller pads n_rows up to a multiple of cap


def _make_kernel(tr, inner, total, batch0_len):
    """Streaming BCE + Dice statistics kernel for a fixed tiling."""
    q_tot, r_tot = divmod(total, _LANE)
    q_b0, r_b0 = divmod(batch0_len, _LANE)
    n_true_rows = -(-total // _LANE)
    n_b0_rows = -(-batch0_len // _LANE)
    n_fold = tr // 8

    def fold(v):                      # (tr, 128) -> (8, 128); pure VPU vreg adds
        return v.reshape(n_fold, 8, _LANE).sum(axis=0)

    def kernel(x_ref, t_ref, out_ref):
        g = pl.program_id(0)
        i = pl.program_id(1)

        @pl.when(i == 0)
        def _():
            out_ref[...] = jnp.zeros_like(out_ref)

        blk = g * inner + i           # logical row-block index
        row0 = blk * tr               # first logical row of this block

        # Block-level scalar predicates: interior blocks skip all mask work, blocks
        # past batch 0 skip the Dice terms, padded/overshoot blocks skip everything.
        has_valid = row0 < n_true_rows
        full_valid = (row0 + tr) <= q_tot
        any_b0 = row0 < n_b0_rows
        full_b0 = (row0 + tr) <= q_b0

        def edge_mask(q, r):
            # Row-based boundary mask; stays in small int32 for any realistic numel.
            rows = row0 + jax.lax.broadcasted_iota(jnp.int32, (tr, _LANE), 0)
            lanes = jax.lax.broadcasted_iota(jnp.int32, (tr, _LANE), 1)
            return (rows < q) | ((rows == q) & (lanes < r))

        @pl.when(has_valid)
        def _():
            x = x_ref[...].astype(jnp.float32)
            t = t_ref[...].astype(jnp.float32)

            # PyTorch-parity BCE: sigmoid + log with clamp at -100 (nn.BCELoss).
            p = jax.nn.sigmoid(x)
            log_p = jnp.maximum(jnp.log(p), _LOG_CLAMP)
            log_1mp = jnp.maximum(jnp.log(1.0 - p), _LOG_CLAMP)
            bce = -(t * log_p + (1.0 - t) * log_1mp)

            @pl.when(full_valid)
            def _():
                out_ref[0, 0] += fold(bce)

            @pl.when(jnp.logical_not(full_valid))
            def _():
                m = edge_mask(q_tot, r_tot)
                out_ref[0, 0] += fold(jnp.where(m, bce, 0.0))

            @pl.when(any_b0)
            def _():
                @pl.when(full_b0)
                def _():
                    out_ref[0, 1] += fold(p * t)
                    out_ref[0, 2] += fold(p * p)
                    out_ref[0, 3] += fold(t * t)

                @pl.when(jnp.logical_not(full_b0))
                def _():
                    m0 = edge_mask(q_b0, r_b0)
                    out_ref[0, 1] += fold(jnp.where(m0, p * t, 0.0))
                    out_ref[0, 2] += fold(jnp.where(m0, p * p, 0.0))
                    out_ref[0, 3] += fold(jnp.where(m0, t * t, 0.0))

    return kernel


@jax.jit
def bce_dice_loss(logits, targets):
    """Pallas implementation of BCEDiceLoss.forward (diagonal=False, sigmoid=True)."""
    # TODO(synk): diagonal=True path (masking the adjacency diagonal) is not implemented;
    # the module default diagonal=False makes ignor_diagonal a no-op.
    assert logits.shape == targets.shape
    batch = logits.shape[0]
    total = int(math.prod(logits.shape))          # BCE 'mean' divisor (all elements)
    batch0_len = total // batch                   # DiceLoss uses logits[0] only

    x = logits.reshape(-1)
    t = targets.reshape(-1)

    # Inputs stay in their native dtype (bf16/int8 targets welcome); kernel upcasts.
    itemsize = max(jnp.dtype(logits.dtype).itemsize, jnp.dtype(targets.dtype).itemsize)
    row_mult = 8 if itemsize >= 4 else 16         # 16-row multiples for packed dtypes
    max_tr = _MAX_TR_F32 if itemsize >= 4 else 2 * _MAX_TR_F32

    # Lane-dense (rows, 128) view. tr is picked so it divides n_rows whenever a decent
    # divisor exists; otherwise rows are padded so no block is ever ragged.
    n_rows = _round_up(-(-total // _LANE), row_mult)
    tr = _choose_tr(n_rows, max_tr, row_mult)
    if n_rows % tr:
        n_rows = _round_up(n_rows, tr)

    padded = n_rows * _LANE
    if padded != total:                           # only copies for awkward sizes
        x = jnp.pad(x, (0, padded - total))
        t = jnp.pad(t, (0, padded - total))
    x2 = x.reshape(n_rows, _LANE)
    t2 = t.reshape(n_rows, _LANE)

    n_row_blocks = n_rows // tr
    n_par = max(1, min(_num_tensorcores(), n_row_blocks))   # 2 only on v7x
    inner = -(-n_row_blocks // n_par)

    def in_map(g, i):
        # Clamp only guards the (at most n_par-1) overshoot steps; their compute is
        # fully skipped inside the kernel via the has_valid predicate.
        return (jnp.minimum(g * inner + i, n_row_blocks - 1), 0)

    kernel = _make_kernel(tr, inner, total, batch0_len)

    # Double-buffered inputs + generous headroom for elementwise temporaries.
    block_bytes = tr * _LANE * (jnp.dtype(logits.dtype).itemsize
                                + jnp.dtype(targets.dtype).itemsize)
    vmem_limit = int(min(2 * block_bytes + (24 << 20), 96 << 20))

    partial = pl.pallas_call(
        kernel,
        out_shape=jax.ShapeDtypeStruct((n_par, 4, 8, _LANE), jnp.float32),
        grid_spec=pltpu.PrefetchScalarGridSpec(
            num_scalar_prefetch=0,
            grid=(n_par, inner),
            in_specs=[
                pl.BlockSpec((tr, _LANE), in_map),
                pl.BlockSpec((tr, _LANE), in_map),
            ],
            out_specs=pl.BlockSpec((1, 4, 8, _LANE), lambda g, i: (g, 0, 0, 0)),
        ),
        compiler_params=pltpu.CompilerParams(
            dimension_semantics=("parallel", "arbitrary"),
            vmem_limit_bytes=vmem_limit,
        ),
    )(x2, t2)

    stats = jnp.sum(partial, axis=(0, 2, 3))      # (4,) tiny final reduce in XLA
    bce_sum, inter, p_sq, t_sq = stats[0], stats[1], stats[2], stats[3]

    bce_loss = bce_sum / total                    # nn.BCELoss(reduction='mean')
    dice = (2.0 * inter + _SMOOTH) / (p_sq + t_sq + _SMOOTH)
    return bce_loss + (1.0 - dice)


def _reference_loss(logits, targets):
    """Pure-JAX mirror of the PyTorch BCEDiceLoss module (defaults), for a check."""
    p = jax.nn.sigmoid(logits.astype(jnp.float32))
    t = targets.astype(jnp.float32)
    log_p = jnp.maximum(jnp.log(p), _LOG_CLAMP)
    log_1mp = jnp.maximum(jnp.log(1.0 - p), _LOG_CLAMP)
    bce = jnp.mean(-(t * log_p + (1.0 - t) * log_1mp))
    p0 = p[0].reshape(-1)
    t0 = t[0].reshape(-1)
    inter = jnp.sum(p0 * t0)
    dice = (2.0 * inter + _SMOOTH) / (jnp.sum(p0 * p0) + jnp.sum(t0 * t0) + _SMOOTH)
    return bce + (1.0 - dice)


if __name__ == "__main__":
    key = jax.random.PRNGKey(0)
    k1, k2 = jax.random.split(key)

    # [Batch, Channels, H, W] — lane-aligned case (no padding, interior fast path).
    B, C, H, W = 2, 4, 16, 16
    logits = jax.random.normal(k1, (B, C, H, W), dtype=jnp.float32)
    targets = (jax.random.uniform(k2, (B, C, H, W)) > 0.7).astype(jnp.float32)

    loss = jax.block_until_ready(bce_dice_loss(logits, targets))
    ref = _reference_loss(logits, targets)
    assert jnp.allclose(loss, ref, rtol=1e-4, atol=1e-5), (loss, ref)

    # Ragged shape exercising the padding + row-based edge-mask paths.
    shp = (2, 3, 11, 13)
    l2 = jax.random.normal(k1, shp, dtype=jnp.float32)
    t2 = (jax.random.uniform(k2, shp) > 0.5).astype(jnp.float32)
    loss2 = jax.block_until_ready(bce_dice_loss(l2, t2))
    ref2 = _reference_loss(l2, t2)
    assert jnp.allclose(loss2, ref2, rtol=1e-4, atol=1e-5), (loss2, ref2)

    print("KERNEL_OK")
</pallas_src>

<mosaic_0001>
module attributes {stable_mosaic.version = 11 : i64} {
  func.func @kernel(%arg0: i32, %arg1: i32, %arg2: memref<16x128xf32, #tpu.memory_space<vmem>>, %arg3: memref<16x128xf32, #tpu.memory_space<vmem>>, %arg4: memref<1x4x8x128xf32, #tpu.memory_space<vmem>>) attributes {dimension_semantics = [#tpu.dimension_semantics<parallel>, #tpu.dimension_semantics<arbitrary>], iteration_bounds = array<i64: 1, 1>, scalar_prefetch = 0 : i64, scratch_operands = 0 : i64, tpu.core_type = #tpu.core_type<tc>, window_params = [{transform_indices = @transform_0, window_bounds = array<i64: 16, 128>}, {transform_indices = @transform_1, window_bounds = array<i64: 16, 128>}, {transform_indices = @transform_2, window_bounds = array<i64: 1, 4, 8, 128>}]} {
    %c0_i32 = arith.constant 0 : i32
    %0 = arith.cmpi eq, %arg1, %c0_i32 : i32
    %1 = arith.extui %0 : i1 to i32
    %c0_i32_0 = arith.constant 0 : i32
    %2 = arith.cmpi ne, %1, %c0_i32_0 : i32
    scf.if %2 {
      %cst = arith.constant 0.000000e+00 : f32
      %14 = vector.broadcast %cst : f32 to vector<1x4x8x128xf32>
      %c0 = arith.constant 0 : index
      %c0_7 = arith.constant 0 : index
      %c0_8 = arith.constant 0 : index
      %c0_9 = arith.constant 0 : index
      %15 = vector.load %arg4[%c0, %c0_7, %c0_8, %c0_9] : memref<1x4x8x128xf32, #tpu.memory_space<vmem>>, vector<1x4x8x128xf32>
      tpu.vector_store %arg4[%c0, %c0_7, %c0_8, %c0_9], %14 {strides = array<i32>} : memref<1x4x8x128xf32, #tpu.memory_space<vmem>>, vector<1x4x8x128xf32>,
    } else {
    }
    %c1_i32 = arith.constant 1 : i32
    %3 = arith.muli %arg0, %c1_i32 : i32
    %4 = arith.addi %3, %arg1 : i32
    %c16_i32 = arith.constant 16 : i32
    %5 = arith.muli %4, %c16_i32 : i32
    %c16_i32_1 = arith.constant 16 : i32
    %6 = arith.cmpi slt, %5, %c16_i32_1 : i32
    %c16_i32_2 = arith.constant 16 : i32
    %7 = arith.addi %5, %c16_i32_2 : i32
    %c16_i32_3 = arith.constant 16 : i32
    %8 = arith.cmpi sle, %7, %c16_i32_3 : i32
    %c8_i32 = arith.constant 8 : i32
    %9 = arith.cmpi slt, %5, %c8_i32 : i32
    %c16_i32_4 = arith.constant 16 : i32
    %10 = arith.addi %5, %c16_i32_4 : i32
    %c8_i32_5 = arith.constant 8 : i32
    %11 = arith.cmpi sle, %10, %c8_i32_5 : i32
    %12 = arith.extui %6 : i1 to i32
    %c0_i32_6 = arith.constant 0 : i32
    %13 = arith.cmpi ne, %12, %c0_i32_6 : i32
    scf.if %13 {
      %c0 = arith.constant 0 : index
      %c0_7 = arith.constant 0 : index
      %14 = vector.load %arg2[%c0, %c0_7] : memref<16x128xf32, #tpu.memory_space<vmem>>, vector<16x128xf32>
      %c0_8 = arith.constant 0 : index
      %c0_9 = arith.constant 0 : index
      %15 = vector.load %arg3[%c0_8, %c0_9] : memref<16x128xf32, #tpu.memory_space<vmem>>, vector<16x128xf32>
      %16 = arith.negf %14 : vector<16x128xf32>
      %17 = math.exp %16 : vector<16x128xf32>
      %cst = arith.constant 1.000000e+00 : f32
      %18 = vector.broadcast %cst : f32 to vector<16x128xf32>
      %19 = arith.addf %18, %17 : vector<16x128xf32>
      %20 = arith.divf %18, %19 : vector<16x128xf32>
      %21 = math.log %20 : vector<16x128xf32>
      %cst_10 = arith.constant -1.000000e+02 : f32
      %22 = vector.broadcast %cst_10 : f32 to vector<16x128xf32>
      %23 = arith.maximumf %21, %22 : vector<16x128xf32>
      %cst_11 = arith.constant 1.000000e+00 : f32
      %24 = vector.broadcast %cst_11 : f32 to vector<16x128xf32>
      %25 = arith.subf %24, %20 : vector<16x128xf32>
      %26 = math.log %25 : vector<16x128xf32>
      %cst_12 = arith.constant -1.000000e+02 : f32
      %27 = vector.broadcast %cst_12 : f32 to vector<16x128xf32>
      %28 = arith.maximumf %26, %27 : vector<16x128xf32>
      %29 = arith.mulf %15, %23 : vector<16x128xf32>
      %cst_13 = arith.constant 1.000000e+00 : f32
      %30 = vector.broadcast %cst_13 : f32 to vector<16x128xf32>
      %31 = arith.subf %30, %15 : vector<16x128xf32>
      %32 = arith.mulf %31, %28 : vector<16x128xf32>
      %33 = arith.addf %29, %32 : vector<16x128xf32>
      %cst_14 = arith.constant 0.000000e+00 : f32
      %34 = vector.broadcast %cst_14 : f32 to vector<16x128xf32>
      %35 = arith.subf %34, %33 : vector<16x128xf32>
      %36 = arith.extui %8 : i1 to i32
      %c0_i32_15 = arith.constant 0 : i32
      %37 = arith.cmpi ne, %36, %c0_i32_15 : i32
      scf.if %37 {
        %c0_18 = arith.constant 0 : index
        %c0_19 = arith.constant 0 : index
        %c0_20 = arith.constant 0 : index
        %c0_21 = arith.constant 0 : index
        %43 = vector.load %arg4[%c0_18, %c0_19, %c0_20, %c0_21] : memref<1x4x8x128xf32, #tpu.memory_space<vmem>>, vector<1x1x8x128xf32>
        %44 = vector.shape_cast %43 : vector<1x1x8x128xf32> to vector<8x128xf32>
        %45 = vector.shape_cast %35 : vector<16x128xf32> to vector<2x8x128xf32>
        %cst_22 = arith.constant dense<0.000000e+00> : vector<8x128xf32>
        %46 = vector.multi_reduction <add>, %45, %cst_22 [0] : vector<2x8x128xf32> to vector<8x128xf32>
        %47 = arith.addf %44, %46 : vector<8x128xf32>
        %c0_23 = arith.constant 0 : index
        %c0_24 = arith.constant 0 : index
        %c0_25 = arith.constant 0 : index
        %c0_26 = arith.constant 0 : index
        %48 = vector.load %arg4[%c0_23, %c0_24, %c0_25, %c0_26] : memref<1x4x8x128xf32, #tpu.memory_space<vmem>>, vector<1x1x8x128xf32>
        %49 = vector.shape_cast %48 : vector<1x1x8x128xf32> to vector<8x128xf32>
        %50 = vector.shape_cast %47 : vector<8x128xf32> to vector<1x1x8x128xf32>
        tpu.vector_store %arg4[%c0_23, %c0_24, %c0_25, %c0_26], %50 {strides = array<i32>} : memref<1x4x8x128xf32, #tpu.memory_space<vmem>>, vector<1x1x8x128xf32>,
      } else {
      }
      %true = arith.constant true
      %38 = arith.xori %8, %true : i1
      %39 = arith.extui %38 : i1 to i32
      %c0_i32_16 = arith.constant 0 : i32
      %40 = arith.cmpi ne, %39, %c0_i32_16 : i32
      scf.if %40 {
        %43 = tpu.iota {dimensions = array<i32: 0>} : vector<16x128xi32>
        %44 = vector.broadcast %5 : i32 to vector<16x128xi32>
        %45 = arith.addi %44, %43 : vector<16x128xi32>
        %46 = tpu.iota {dimensions = array<i32: 1>} : vector<16x128xi32>
        %c16_i32_18 = arith.constant 16 : i32
        %47 = vector.broadcast %c16_i32_18 : i32 to vector<16x128xi32>
        %48 = arith.cmpi slt, %45, %47 : vector<16x128xi32>
        %c16_i32_19 = arith.constant 16 : i32
        %49 = vector.broadcast %c16_i32_19 : i32 to vector<16x128xi32>
        %50 = arith.cmpi eq, %45, %49 : vector<16x128xi32>
        %c0_i32_20 = arith.constant 0 : i32
        %51 = vector.broadcast %c0_i32_20 : i32 to vector<16x128xi32>
        %52 = arith.cmpi slt, %46, %51 : vector<16x128xi32>
        %53 = arith.andi %50, %52 : vector<16x128xi1>
        %54 = arith.ori %48, %53 : vector<16x128xi1>
        %c0_21 = arith.constant 0 : index
        %c0_22 = arith.constant 0 : index
        %c0_23 = arith.constant 0 : index
        %c0_24 = arith.constant 0 : index
        %55 = vector.load %arg4[%c0_21, %c0_22, %c0_23, %c0_24] : memref<1x4x8x128xf32, #tpu.memory_space<vmem>>, vector<1x1x8x128xf32>
        %56 = vector.shape_cast %55 : vector<1x1x8x128xf32> to vector<8x128xf32>
        %cst_25 = arith.constant 0.000000e+00 : f32
        %57 = vector.broadcast %cst_25 : f32 to vector<16x128xf32>
        %58 = arith.select %54, %35, %57 : vector<16x128xi1>, vector<16x128xf32>
        %59 = vector.shape_cast %58 : vector<16x128xf32> to vector<2x8x128xf32>
        %cst_26 = arith.constant dense<0.000000e+00> : vector<8x128xf32>
        %60 = vector.multi_reduction <add>, %59, %cst_26 [0] : vector<2x8x128xf32> to vector<8x128xf32>
        %61 = arith.addf %56, %60 : vector<8x128xf32>
        %c0_27 = arith.constant 0 : index
        %c0_28 = arith.constant 0 : index
        %c0_29 = arith.constant 0 : index
        %c0_30 = arith.constant 0 : index
        %62 = vector.load %arg4[%c0_27, %c0_28, %c0_29, %c0_30] : memref<1x4x8x128xf32, #tpu.memory_space<vmem>>, vector<1x1x8x128xf32>
        %63 = vector.shape_cast %62 : vector<1x1x8x128xf32> to vector<8x128xf32>
        %64 = vector.shape_cast %61 : vector<8x128xf32> to vector<1x1x8x128xf32>
        tpu.vector_store %arg4[%c0_27, %c0_28, %c0_29, %c0_30], %64 {strides = array<i32>} : memref<1x4x8x128xf32, #tpu.memory_space<vmem>>, vector<1x1x8x128xf32>,
      } else {
      }
      %41 = arith.extui %9 : i1 to i32
      %c0_i32_17 = arith.constant 0 : i32
      %42 = arith.cmpi ne, %41, %c0_i32_17 : i32
      scf.if %42 {
        %43 = arith.extui %11 : i1 to i32
        %c0_i32_18 = arith.constant 0 : i32
        %44 = arith.cmpi ne, %43, %c0_i32_18 : i32
        scf.if %44 {
          %c0_21 = arith.constant 0 : index
          %c1 = arith.constant 1 : index
          %c0_22 = arith.constant 0 : index
          %c0_23 = arith.constant 0 : index
          %48 = vector.load %arg4[%c0_21, %c1, %c0_22, %c0_23] : memref<1x4x8x128xf32, #tpu.memory_space<vmem>>, vector<1x1x8x128xf32>
          %49 = vector.shape_cast %48 : vector<1x1x8x128xf32> to vector<8x128xf32>
          %50 = arith.mulf %20, %15 : vector<16x128xf32>
          %51 = vector.shape_cast %50 : vector<16x128xf32> to vector<2x8x128xf32>
          %cst_24 = arith.constant dense<0.000000e+00> : vector<8x128xf32>
          %52 = vector.multi_reduction <add>, %51, %cst_24 [0] : vector<2x8x128xf32> to vector<8x128xf32>
          %53 = arith.addf %49, %52 : vector<8x128xf32>
          %c0_25 = arith.constant 0 : index
          %c1_26 = arith.constant 1 : index
          %c0_27 = arith.constant 0 : index
          %c0_28 = arith.constant 0 : index
          %54 = vector.load %arg4[%c0_25, %c1_26, %c0_27, %c0_28] : memref<1x4x8x128xf32, #tpu.memory_space<vmem>>, vector<1x1x8x128xf32>
          %55 = vector.shape_cast %54 : vector<1x1x8x128xf32> to vector<8x128xf32>
          %56 = vector.shape_cast %53 : vector<8x128xf32> to vector<1x1x8x128xf32>
          tpu.vector_store %arg4[%c0_25, %c1_26, %c0_27, %c0_28], %56 {strides = array<i32>} : memref<1x4x8x128xf32, #tpu.memory_space<vmem>>, vector<1x1x8x128xf32>,
          %c0_29 = arith.constant 0 : index
          %c2 = arith.constant 2 : index
          %c0_30 = arith.constant 0 : index
          %c0_31 = arith.constant 0 : index
          %57 = vector.load %arg4[%c0_29, %c2, %c0_30, %c0_31] : memref<1x4x8x128xf32, #tpu.memory_space<vmem>>, vector<1x1x8x128xf32>
          %58 = vector.shape_cast %57 : vector<1x1x8x128xf32> to vector<8x128xf32>
          %59 = arith.mulf %20, %20 : vector<16x128xf32>
          %60 = vector.shape_cast %59 : vector<16x128xf32> to vector<2x8x128xf32>
          %cst_32 = arith.constant dense<0.000000e+00> : vector<8x128xf32>
          %61 = vector.multi_reduction <add>, %60, %cst_32 [0] : vector<2x8x128xf32> to vector<8x128xf32>
          %62 = arith.addf %58, %61 : vector<8x128xf32>
          %c0_33 = arith.constant 0 : index
          %c2_34 = arith.constant 2 : index
          %c0_35 = arith.constant 0 : index
          %c0_36 = arith.constant 0 : index
          %63 = vector.load %arg4[%c0_33, %c2_34, %c0_35, %c0_36] : memref<1x4x8x128xf32, #tpu.memory_space<vmem>>, vector<1x1x8x128xf32>
          %64 = vector.shape_cast %63 : vector<1x1x8x128xf32> to vector<8x128xf32>
          %65 = vector.shape_cast %62 : vector<8x128xf32> to vector<1x1x8x128xf32>
          tpu.vector_store %arg4[%c0_33, %c2_34, %c0_35, %c0_36], %65 {strides = array<i32>} : memref<1x4x8x128xf32, #tpu.memory_space<vmem>>, vector<1x1x8x128xf32>,
          %c0_37 = arith.constant 0 : index
          %c3 = arith.constant 3 : index
          %c0_38 = arith.constant 0 : index
          %c0_39 = arith.constant 0 : index
          %66 = vector.load %arg4[%c0_37, %c3, %c0_38, %c0_39] : memref<1x4x8x128xf32, #tpu.memory_space<vmem>>, vector<1x1x8x128xf32>
          %67 = vector.shape_cast %66 : vector<1x1x8x128xf32> to vector<8x128xf32>
          %68 = arith.mulf %15, %15 : vector<16x128xf32>
          %69 = vector.shape_cast %68 : vector<16x128xf32> to vector<2x8x128xf32>
          %cst_40 = arith.constant dense<0.000000e+00> : vector<8x128xf32>
          %70 = vector.multi_reduction <add>, %69, %cst_40 [0] : vector<2x8x128xf32> to vector<8x128xf32>
          %71 = arith.addf %67, %70 : vector<8x128xf32>
          %c0_41 = arith.constant 0 : index
          %c3_42 = arith.constant 3 : index
          %c0_43 = arith.constant 0 : index
          %c0_44 = arith.constant 0 : index
          %72 = vector.load %arg4[%c0_41, %c3_42, %c0_43, %c0_44] : memref<1x4x8x128xf32, #tpu.memory_space<vmem>>, vector<1x1x8x128xf32>
          %73 = vector.shape_cast %72 : vector<1x1x8x128xf32> to vector<8x128xf32>
          %74 = vector.shape_cast %71 : vector<8x128xf32> to vector<1x1x8x128xf32>
          tpu.vector_store %arg4[%c0_41, %c3_42, %c0_43, %c0_44], %74 {strides = array<i32>} : memref<1x4x8x128xf32, #tpu.memory_space<vmem>>, vector<1x1x8x128xf32>,
        } else {
        }
        %true_19 = arith.constant true
        %45 = arith.xori %11, %true_19 : i1
        %46 = arith.extui %45 : i1 to i32
        %c0_i32_20 = arith.constant 0 : i32
        %47 = arith.cmpi ne, %46, %c0_i32_20 : i32
        scf.if %47 {
          %48 = tpu.iota {dimensions = array<i32: 0>} : vector<16x128xi32>
          %49 = vector.broadcast %5 : i32 to vector<16x128xi32>
          %50 = arith.addi %49, %48 : vector<16x128xi32>
          %51 = tpu.iota {dimensions = array<i32: 1>} : vector<16x128xi32>
          %c8_i32_21 = arith.constant 8 : i32
          %52 = vector.broadcast %c8_i32_21 : i32 to vector<16x128xi32>
          %53 = arith.cmpi slt, %50, %52 : vector<16x128xi32>
          %c8_i32_22 = arith.constant 8 : i32
          %54 = vector.broadcast %c8_i32_22 : i32 to vector<16x128xi32>
          %55 = arith.cmpi eq, %50, %54 : vector<16x128xi32>
          %c0_i32_23 = arith.constant 0 : i32
          %56 = vector.broadcast %c0_i32_23 : i32 to vector<16x128xi32>
          %57 = arith.cmpi slt, %51, %56 : vector<16x128xi32>
          %58 = arith.andi %55, %57 : vector<16x128xi1>
          %59 = arith.ori %53, %58 : vector<16x128xi1>
          %c0_24 = arith.constant 0 : index
          %c1 = arith.constant 1 : index
          %c0_25 = arith.constant 0 : index
          %c0_26 = arith.constant 0 : index
          %60 = vector.load %arg4[%c0_24, %c1, %c0_25, %c0_26] : memref<1x4x8x128xf32, #tpu.memory_space<vmem>>, vector<1x1x8x128xf32>
          %61 = vector.shape_cast %60 : vector<1x1x8x128xf32> to vector<8x128xf32>
          %62 = arith.mulf %20, %15 : vector<16x128xf32>
          %cst_27 = arith.constant 0.000000e+00 : f32
          %63 = vector.broadcast %cst_27 : f32 to vector<16x128xf32>
          %64 = arith.select %59, %62, %63 : vector<16x128xi1>, vector<16x128xf32>
          %65 = vector.shape_cast %64 : vector<16x128xf32> to vector<2x8x128xf32>
          %cst_28 = arith.constant dense<0.000000e+00> : vector<8x128xf32>
          %66 = vector.multi_reduction <add>, %65, %cst_28 [0] : vector<2x8x128xf32> to vector<8x128xf32>
          %67 = arith.addf %61, %66 : vector<8x128xf32>
          %c0_29 = arith.constant 0 : index
          %c1_30 = arith.constant 1 : index
          %c0_31 = arith.constant 0 : index
          %c0_32 = arith.constant 0 : index
          %68 = vector.load %arg4[%c0_29, %c1_30, %c0_31, %c0_32] : memref<1x4x8x128xf32, #tpu.memory_space<vmem>>, vector<1x1x8x128xf32>
          %69 = vector.shape_cast %68 : vector<1x1x8x128xf32> to vector<8x128xf32>
          %70 = vector.shape_cast %67 : vector<8x128xf32> to vector<1x1x8x128xf32>
          tpu.vector_store %arg4[%c0_29, %c1_30, %c0_31, %c0_32], %70 {strides = array<i32>} : memref<1x4x8x128xf32, #tpu.memory_space<vmem>>, vector<1x1x8x128xf32>,
          %c0_33 = arith.constant 0 : index
          %c2 = arith.constant 2 : index
          %c0_34 = arith.constant 0 : index
          %c0_35 = arith.constant 0 : index
          %71 = vector.load %arg4[%c0_33, %c2, %c0_34, %c0_35] : memref<1x4x8x128xf32, #tpu.memory_space<vmem>>, vector<1x1x8x128xf32>
          %72 = vector.shape_cast %71 : vector<1x1x8x128xf32> to vector<8x128xf32>
          %73 = arith.mulf %20, %20 : vector<16x128xf32>
          %cst_36 = arith.constant 0.000000e+00 : f32
          %74 = vector.broadcast %cst_36 : f32 to vector<16x128xf32>
          %75 = arith.select %59, %73, %74 : vector<16x128xi1>, vector<16x128xf32>
          %76 = vector.shape_cast %75 : vector<16x128xf32> to vector<2x8x128xf32>
          %cst_37 = arith.constant dense<0.000000e+00> : vector<8x128xf32>
          %77 = vector.multi_reduction <add>, %76, %cst_37 [0] : vector<2x8x128xf32> to vector<8x128xf32>
          %78 = arith.addf %72, %77 : vector<8x128xf32>
          %c0_38 = arith.constant 0 : index
          %c2_39 = arith.constant 2 : index
          %c0_40 = arith.constant 0 : index
          %c0_41 = arith.constant 0 : index
          %79 = vector.load %arg4[%c0_38, %c2_39, %c0_40, %c0_41] : memref<1x4x8x128xf32, #tpu.memory_space<vmem>>, vector<1x1x8x128xf32>
          %80 = vector.shape_cast %79 : vector<1x1x8x128xf32> to vector<8x128xf32>
          %81 = vector.shape_cast %78 : vector<8x128xf32> to vector<1x1x8x128xf32>
          tpu.vector_store %arg4[%c0_38, %c2_39, %c0_40, %c0_41], %81 {strides = array<i32>} : memref<1x4x8x128xf32, #tpu.memory_space<vmem>>, vector<1x1x8x128xf32>,
          %c0_42 = arith.constant 0 : index
          %c3 = arith.constant 3 : index
          %c0_43 = arith.constant 0 : index
          %c0_44 = arith.constant 0 : index
          %82 = vector.load %arg4[%c0_42, %c3, %c0_43, %c0_44] : memref<1x4x8x128xf32, #tpu.memory_space<vmem>>, vector<1x1x8x128xf32>
          %83 = vector.shape_cast %82 : vector<1x1x8x128xf32> to vector<8x128xf32>
          %84 = arith.mulf %15, %15 : vector<16x128xf32>
          %cst_45 = arith.constant 0.000000e+00 : f32
          %85 = vector.broadcast %cst_45 : f32 to vector<16x128xf32>
          %86 = arith.select %59, %84, %85 : vector<16x128xi1>, vector<16x128xf32>
          %87 = vector.shape_cast %86 : vector<16x128xf32> to vector<2x8x128xf32>
          %cst_46 = arith.constant dense<0.000000e+00> : vector<8x128xf32>
          %88 = vector.multi_reduction <add>, %87, %cst_46 [0] : vector<2x8x128xf32> to vector<8x128xf32>
          %89 = arith.addf %83, %88 : vector<8x128xf32>
          %c0_47 = arith.constant 0 : index
          %c3_48 = arith.constant 3 : index
          %c0_49 = arith.constant 0 : index
          %c0_50 = arith.constant 0 : index
          %90 = vector.load %arg4[%c0_47, %c3_48, %c0_49, %c0_50] : memref<1x4x8x128xf32, #tpu.memory_space<vmem>>, vector<1x1x8x128xf32>
          %91 = vector.shape_cast %90 : vector<1x1x8x128xf32> to vector<8x128xf32>
          %92 = vector.shape_cast %89 : vector<8x128xf32> to vector<1x1x8x128xf32>
          tpu.vector_store %arg4[%c0_47, %c3_48, %c0_49, %c0_50], %92 {strides = array<i32>} : memref<1x4x8x128xf32, #tpu.memory_space<vmem>>, vector<1x1x8x128xf32>,
        } else {
        }
      } else {
      }
    } else {
    }
    return
  }
  func.func @transform_0(%arg0: i32, %arg1: i32) -> (i32, i32) {
    %c1_i32 = arith.constant 1 : i32
    %0 = arith.muli %arg0, %c1_i32 : i32
    %1 = arith.addi %0, %arg1 : i32
    %c0_i32 = arith.constant 0 : i32
    %2 = arith.minsi %1, %c0_i32 : i32
    %c0_i32_0 = arith.constant 0 : i32
    %c0_i32_1 = arith.constant 0 : i32
    return %2, %c0_i32_0 : i32, i32
  }
  func.func @transform_1(%arg0: i32, %arg1: i32) -> (i32, i32) {
    %c1_i32 = arith.constant 1 : i32
    %0 = arith.muli %arg0, %c1_i32 : i32
    %1 = arith.addi %0, %arg1 : i32
    %c0_i32 = arith.constant 0 : i32
    %2 = arith.minsi %1, %c0_i32 : i32
    %c0_i32_0 = arith.constant 0 : i32
    %c0_i32_1 = arith.constant 0 : i32
    return %2, %c0_i32_0 : i32, i32
  }
  func.func @transform_2(%arg0: i32, %arg1: i32) -> (i32, i32, i32, i32) {
    %c0_i32 = arith.constant 0 : i32
    %c0_i32_0 = arith.constant 0 : i32
    %c0_i32_1 = arith.constant 0 : i32
    %c0_i32_2 = arith.constant 0 : i32
    return %arg0, %c0_i32, %c0_i32_0, %c0_i32_1 : i32, i32, i32, i32
  }
}

</mosaic_0001>

<llo_original>
// kernel: bce_dice_loss.1
$region0: #{bce_dice_loss.1}
  #allocation0 [shape = 'u32[]', space=smem, size = 0x4, offset = 0x4, fixed_abs, tag = 'smem constant byte address 0x4 - core index']
  #allocation1 [shape = 'u32[144,128]{1,0:T(1,128)}', space=vmem, size = 0x12000, scoped, tag = 'internal scratch']
  %s0 = inlined_call_operand.vmem [shape: f32[16,128], index: 0, kind: input, shape index: {}]
  %s1 = inlined_call_operand.vmem [shape: f32[16,128], index: 1, kind: input, shape index: {}]
  %s2 = inlined_call_operand.vmem [shape: f32[1,4,8,128], index: 2, kind: output, shape index: {}]
  %s3 = sld [smem:[#allocation0]]
  $region46: #{bce_dice_loss.1} parent=0
    _
  %s5 = ssub.s32 1, %s3
  %s6 = scalar_select 0, %s5, %s3
  // Predicated region
  $region2: #{bce_dice_loss.1} parent=0 // pred_check
    _
  $region3: #{bce_dice_loss.1} parent=0 // pred_check_branch
    %8 = sbr.rel (0) target = $region5
  $region4: #{bce_dice_loss.1} parent=0 // pred_region
    %s9 = sadd.s32 0, 0
    %p10 = scmp.lt.s32.totalorder %s9, 0
    %s11 = scalar_select %p10, %s9, 0
    %s12 = smul.u32 2, %s11
    %p13 = scmp.lt.s32.totalorder %s12, 1
    %s14 = scalar_select %p13, %s12, 1
    %s15 = smul.addr %s14, 8
    %s16 = scalar_lea.vmem %s0, %s15
    %s17 = sadd.s32 0, 0
    %p18 = scmp.lt.s32.totalorder %s17, 0
    %s19 = scalar_select %p18, %s17, 0
    %s20 = smul.u32 2, %s19
  $region5: #{bce_dice_loss.1} parent=0 // pred_fallthru
    _
  // Predicated region
  $region6: #{bce_dice_loss.1} parent=0 // pred_check
    _
  $region7: #{bce_dice_loss.1} parent=0 // pred_check_branch
    %22 = sbr.rel (0) target = $region9
  $region8: #{bce_dice_loss.1} parent=0 // pred_region
    %s23 = sadd.s32 0, 0
    %p24 = scmp.lt.s32.totalorder %s23, 0
    %s25 = scalar_select %p24, %s23, 0
    %s26 = smul.u32 2, %s25
    %p27 = scmp.lt.s32.totalorder %s26, 1
    %s28 = scalar_select %p27, %s26, 1
    %s29 = smul.addr %s28, 8
    %s30 = scalar_lea.vmem %s1, %s29
    %s31 = sadd.s32 0, 0
    %p32 = scmp.lt.s32.totalorder %s31, 0
    %s33 = scalar_select %p32, %s31, 0
    %s34 = smul.u32 2, %s33
  $region9: #{bce_dice_loss.1} parent=0 // pred_fallthru
    _
  %s35 = sadd.s32 0, 0
  %p36 = scmp.lt.s32.totalorder %s35, 0
  %s37 = scalar_select %p36, %s35, 0
  %s38 = smul.u32 2, %s37
  %p39 = scmp.lt.s32.totalorder %s38, 1
  %s40 = scalar_select %p39, %s38, 1
  %s41 = smul.addr %s40, 8
  %s42 = scalar_lea.vmem %s0, %s41
  %s43 = sadd.s32 0, 0
  %p44 = scmp.lt.s32.totalorder %s43, 0
  %s45 = scalar_select %p44, %s43, 0
  %s46 = smul.u32 2, %s45
  %p47 = scmp.lt.s32.totalorder %s46, 1
  %s48 = scalar_select %p47, %s46, 1
  %s49 = smul.addr %s48, 8
  %s50 = scalar_lea.vmem %s1, %s49
  %s51 = sadd.s32 0, 0
  %p52 = scmp.lt.s32.totalorder %s51, 0
  %s53 = scalar_select %p52, %s51, 0
  %s54 = smul.u32 2, %s53
  %p55 = scmp.lt.s32.totalorder %s54, 1
  %s56 = scalar_select %p55, %s54, 1
  %s57 = smul.addr %s56, 8
  %s58 = scalar_lea.vmem %s0, %s57
  %s59 = sadd.s32 0, 0
  %p60 = scmp.lt.s32.totalorder %s59, 0
  %s61 = scalar_select %p60, %s59, 0
  %s62 = smul.u32 2, %s61
  %s63 = sadd.s32 0, 0
  %p64 = scmp.lt.s32.totalorder %s63, 0
  %s65 = scalar_select %p64, %s63, 0
  %s66 = smul.u32 2, %s65
  %p67 = scmp.lt.s32.totalorder %s66, 1
  %s68 = scalar_select %p67, %s66, 1
  %s69 = smul.addr %s68, 8
  %s70 = scalar_lea.vmem %s1, %s69
  %s71 = sadd.s32 0, 0
  %p72 = scmp.lt.s32.totalorder %s71, 0
  %s73 = scalar_select %p72, %s71, 0
  %s74 = smul.u32 2, %s73
  %p75 = scmp.eq.s32.totalorder 0, 0
  // Predicated region
  $region10: #{bce_dice_loss.1} parent=0 // pred_check
    %p76 = pneg %p75
  $region11: #{bce_dice_loss.1} parent=0 // pred_check_branch
    %78 = sbr.rel (%p76) target = $region13
  $region12: #{bce_dice_loss.1} parent=0 // pred_region
    %79 = vst [vmem:[%s2] sm:$0xff] 0.0
    %80 = vst [vmem:[%s2 + $0x8] sm:$0xff] 0.0
    %81 = vst [vmem:[%s2 + $0x10] sm:$0xff] 0.0
    %82 = vst [vmem:[%s2 + $0x18] sm:$0xff] 0.0
  $region13: #{bce_dice_loss.1} parent=0 // pred_fallthru
    _
  %s83 = sadd.s32 0, 0
  %s84 = smul.u32 %s83, 16
  %p85 = scmp.lt.s32.totalorder %s84, 16
  %s86 = sadd.s32 %s84, 16
  %p87 = scmp.le.s32.totalorder %s86, 16
  %p88 = scmp.lt.s32.totalorder %s84, 8
  %p89 = scmp.le.s32.totalorder %s86, 8
  // Predicated region
  $region14: #{bce_dice_loss.1} parent=0 // pred_check
    %p90 = pneg %p85
  $region15: #{bce_dice_loss.1} parent=0 // pred_check_branch
    %92 = sbr.rel (%p90) target = $region17
  $region16: #{bce_dice_loss.1} parent=0 // pred_region
    %v93 = vld [vmem:[%s58] sm:$0xff]
    %v94 = vld [vmem:[%s58 + $0x8] sm:$0xff]
    %v95 = vld [vmem:[%s70] sm:$0xff]
    %v96 = vld [vmem:[%s70 + $0x8] sm:$0xff]
    %v97 = vxor.u32 %v93, 2147483648
    %v98 = vxor.u32 %v94, 2147483648
    %v99 = vmul.f32 %v97, 1.442695
    %v100 = vpow.pop %v99
    %v101 = vmul.f32 %v98, 1.442695
    %v102 = vpow.pop %v101
    %v103 = vadd.f32 %v100, 1.0
    %v104 = vadd.f32 %v102, 1.0
    %v105 = vrcp.pop %v103
    %v106 = vmul.f32 1.0, %v105
    %v107 = vrcp.pop %v104
    %v108 = vmul.f32 1.0, %v107
    %v109 = vlog2.pop %v106
    %v110 = vmul.f32 %v109, 0.6931472
    %v111 = vlog2.pop %v108
    %v112 = vmul.f32 %v111, 0.6931472
    %v113 = vmax.f32 %v110, -100.0
    %v114 = vmax.f32 %v112, -100.0
    %v115 = vsub.f32 1.0, %v106
    %v116 = vsub.f32 1.0, %v108
    %v117 = vlog2.pop %v115
    %v118 = vmul.f32 %v117, 0.6931472
    %v119 = vlog2.pop %v116
    %v120 = vmul.f32 %v119, 0.6931472
    %v121 = vmax.f32 %v118, -100.0
    %v122 = vmax.f32 %v120, -100.0
    %v123 = vmul.f32 %v95, %v113
    %v124 = vmul.f32 %v96, %v114
    %v125 = vsub.f32 1.0, %v95
    %v126 = vsub.f32 1.0, %v96
    %v127 = vmul.f32 %v125, %v121
    %v128 = vmul.f32 %v126, %v122
    %v129 = vadd.f32 %v123, %v127
    %v130 = vadd.f32 %v124, %v128
    %v131 = vsub.f32 0.0, %v129
    %v132 = vsub.f32 0.0, %v130
    // Predicated region
    $region18: #{bce_dice_loss.1} parent=16 // pred_check
      %p133 = pneg %p87
    $region19: #{bce_dice_loss.1} parent=16 // pred_check_branch
      %135 = sbr.rel (%p133) target = $region21
    $region20: #{bce_dice_loss.1} parent=16 // pred_region
      %v136 = vld [vmem:[%s2] sm:$0xff]
      %v137 = vadd.f32 %v131, %v132
      %v138 = vadd.f32 %v136, %v137
      %139 = vst [vmem:[%s2] sm:$0xff] %v138
    $region21: #{bce_dice_loss.1} parent=16 // pred_fallthru
      _
    %p140 = scmp.gt.s32.totalorder %s86, 16
    // Predicated region
    $region22: #{bce_dice_loss.1} parent=16 // pred_check
      %p141 = pneg %p140
    $region23: #{bce_dice_loss.1} parent=16 // pred_check_branch
      %143 = sbr.rel (%p141) target = $region25
    $region24: #{bce_dice_loss.1} parent=16 // pred_region
      %v144 = vlaneseq
      %v145 = vshrl.u32 %v144, 7
      %v146 = vadd.s32 %v145, 8
      %v147 = vstv %s84
      %v148 = vadd.s32 %v147, %v145
      %v149 = vadd.s32 %v147, %v146
      %v150 = vlaneseq
      %v151 = vand.u32 %v150, 127
      %vm152 = vcmp.lt.s32.totalorder %v148, 16
      %vm153 = vcmp.lt.s32.totalorder %v149, 16
      %vm154 = vcmp.eq.s32.totalorder %v148, 16
      %vm155 = vcmp.eq.s32.totalorder %v149, 16
      %vm156 = vcmp.lt.s32.totalorder %v151, 0
      %vm157 = vmand %vm154, %vm156
      %vm158 = vmand %vm155, %vm156
      %vm159 = vmor %vm152, %vm157
      %vm160 = vmor %vm153, %vm158
      %v161 = vld [vmem:[%s2] sm:$0xff]
      %v162 = vsel %vm159, %v131, 0.0
      %v163 = vsel %vm160, %v132, 0.0
      %v164 = vadd.f32 %v162, %v163
      %v165 = vadd.f32 %v161, %v164
      %166 = vst [vmem:[%s2] sm:$0xff] %v165
    $region25: #{bce_dice_loss.1} parent=16 // pred_fallthru
      _
    // Predicated region
    $region26: #{bce_dice_loss.1} parent=16 // pred_check
      %p167 = pneg %p88
    $region27: #{bce_dice_loss.1} parent=16 // pred_check_branch
      %169 = sbr.rel (%p167) target = $region29
    $region28: #{bce_dice_loss.1} parent=16 // pred_region
      // Predicated region
      $region30: #{bce_dice_loss.1} parent=28 // pred_check
        %p170 = pneg %p89
      $region31: #{bce_dice_loss.1} parent=28 // pred_check_branch
        %172 = sbr.rel (%p170) target = $region33
      $region32: #{bce_dice_loss.1} parent=28 // pred_region
        %s173 = scalar_lea.vmem %s2, 8
        %v174 = vld [vmem:[%s173] sm:$0xff]
        %v175 = vmul.f32 %v106, %v95
        %v176 = vmul.f32 %v108, %v96
        %v177 = vadd.f32 %v175, %v176
        %v178 = vadd.f32 %v174, %v177
        %179 = vst [vmem:[%s173] sm:$0xff] %v178
        %s180 = scalar_lea.vmem %s2, 16
        %v181 = vld [vmem:[%s180] sm:$0xff]
        %v182 = vmul.f32 %v106, %v106
        %v183 = vmul.f32 %v108, %v108
        %v184 = vadd.f32 %v182, %v183
        %v185 = vadd.f32 %v181, %v184
        %186 = vst [vmem:[%s180] sm:$0xff] %v185
        %s187 = scalar_lea.vmem %s2, 24
        %v188 = vld [vmem:[%s187] sm:$0xff]
        %v189 = vmul.f32 %v95, %v95
        %v190 = vmul.f32 %v96, %v96
        %v191 = vadd.f32 %v189, %v190
        %v192 = vadd.f32 %v188, %v191
        %193 = vst [vmem:[%s187] sm:$0xff] %v192
      $region33: #{bce_dice_loss.1} parent=28 // pred_fallthru
        _
      %p194 = scmp.gt.s32.totalorder %s86, 8
      // Predicated region
      $region34: #{bce_dice_loss.1} parent=28 // pred_check
        %p195 = pneg %p194
      $region35: #{bce_dice_loss.1} parent=28 // pred_check_branch
        %197 = sbr.rel (%p195) target = $region37
      $region36: #{bce_dice_loss.1} parent=28 // pred_region
        %v198 = vlaneseq
        %v199 = vshrl.u32 %v198, 7
        %v200 = vadd.s32 %v199, 8
        %v201 = vstv %s84
        %v202 = vadd.s32 %v201, %v199
        %v203 = vadd.s32 %v201, %v200
        %v204 = vlaneseq
        %v205 = vand.u32 %v204, 127
        %vm206 = vcmp.lt.s32.totalorder %v202, 8
        %vm207 = vcmp.lt.s32.totalorder %v203, 8
        %vm208 = vcmp.eq.s32.totalorder %v202, 8
        %vm209 = vcmp.eq.s32.totalorder %v203, 8
        %vm210 = vcmp.lt.s32.totalorder %v205, 0
        %vm211 = vmand %vm208, %vm210
        %vm212 = vmand %vm209, %vm210
        %vm213 = vmor %vm206, %vm211
        %vm214 = vmor %vm207, %vm212
        %s215 = scalar_lea.vmem %s2, 8
        %v216 = vld [vmem:[%s215] sm:$0xff]
        %v217 = vmul.f32 %v106, %v95
        %v218 = vmul.f32 %v108, %v96
        %v219 = vsel %vm213, %v217, 0.0
        %v220 = vsel %vm214, %v218, 0.0
        %v221 = vadd.f32 %v219, %v220
        %v222 = vadd.f32 %v216, %v221
        %223 = vst [vmem:[%s215] sm:$0xff] %v222
        %s224 = scalar_lea.vmem %s2, 16
        %v225 = vld [vmem:[%s224] sm:$0xff]
        %v226 = vmul.f32 %v106, %v106
        %v227 = vmul.f32 %v108, %v108
        %v228 = vsel %vm213, %v226, 0.0
        %v229 = vsel %vm214, %v227, 0.0
        %v230 = vadd.f32 %v228, %v229
        %v231 = vadd.f32 %v225, %v230
        %232 = vst [vmem:[%s224] sm:$0xff] %v231
        %s233 = scalar_lea.vmem %s2, 24
        %v234 = vld [vmem:[%s233] sm:$0xff]
        %v235 = vmul.f32 %v95, %v95
        %v236 = vmul.f32 %v96, %v96
        %v237 = vsel %vm213, %v235, 0.0
        %v238 = vsel %vm214, %v236, 0.0
        %v239 = vadd.f32 %v237, %v238
        %v240 = vadd.f32 %v234, %v239
        %241 = vst [vmem:[%s233] sm:$0xff] %v240
      $region37: #{bce_dice_loss.1} parent=28 // pred_fallthru
        _
    $region29: #{bce_dice_loss.1} parent=16 // pred_fallthru
      _
  $region17: #{bce_dice_loss.1} parent=0 // pred_fallthru
    _
  // Predicated region
  $region38: #{bce_dice_loss.1} parent=0 // pred_check
    _
  $region39: #{bce_dice_loss.1} parent=0 // pred_check_branch
    %243 = sbr.rel (0) target = $region41
  $region40: #{bce_dice_loss.1} parent=0 // pred_region
    _
  $region41: #{bce_dice_loss.1} parent=0 // pred_fallthru
    _
  // Predicated region
  $region42: #{bce_dice_loss.1} parent=0 // pred_check
    _
  $region43: #{bce_dice_loss.1} parent=0 // pred_check_branch
    %245 = sbr.rel (0) target = $region45
  $region44: #{bce_dice_loss.1} parent=0 // pred_region
    _
  $region45: #{bce_dice_loss.1} parent=0 // pred_fallthru
    _

</llo_original>
